<compile_context>
chip_gen: v6e
topology: v6e:2x2x1
jax: 0.10.0
libtpu: 0.0.40
codegen_flags: <defaults>
</compile_context>

<pallas_src>
import jax
import jax.numpy as jnp
from jax.experimental import pallas as pl
from jax.experimental.pallas import tpu as pltpu


def _hbm_copy_kernel(x_hbm_ref, o_hbm_ref, copy_sem):
    # Identity forward: one whole-array HBM->HBM DMA. The DMA engine moves the
    # bytes; no VMEM staging, no vector load/store slots, no grid pipeline.
    cp = pltpu.make_async_copy(x_hbm_ref, o_hbm_ref, copy_sem)
    cp.start()
    cp.wait()


def _materialized_identity(x):
    nbytes = x.size * jnp.dtype(x.dtype).itemsize
    return pl.pallas_call(
        _hbm_copy_kernel,
        out_shape=jax.ShapeDtypeStruct(x.shape, x.dtype),
        # pl.ANY => refs stay in HBM; the kernel body DMAs them directly.
        in_specs=[pl.BlockSpec(memory_space=pl.ANY)],
        out_specs=pl.BlockSpec(memory_space=pl.ANY),
        scratch_shapes=[pltpu.SemaphoreType.DMA],
        cost_estimate=pl.CostEstimate(
            flops=0, transcendentals=0, bytes_accessed=2 * nbytes
        ),
    )(x)


def dummy_layer_norm(x, normalized_shape=None, eps=1e-5, *, materialize=False):
    """Pallas implementation of DummyLayerNorm.forward (identity).

    `normalized_shape` / `eps` are accepted for API parity with the PyTorch
    module but unused, exactly as in the reference.

    By default this returns x directly (the fastest correct implementation of
    an identity op: no kernel launch, no HBM traffic). Pass materialize=True
    only if a framework constraint requires a freshly allocated output buffer;
    that path runs a single HBM->HBM DMA copy kernel.
    """
    if not materialize:
        return x
    return _materialized_identity(x)


if __name__ == "__main__":
    key = jax.random.PRNGKey(0)
    k1, k2 = jax.random.split(key)

    # GPT-style small activation: batch=2, seq=8, emb=32.
    x = jax.random.normal(k1, (2, 8, 32), dtype=jnp.float32)

    # Default (fast) path: identity returns x with no kernel launch.
    y_fast = jax.block_until_ready(dummy_layer_norm(x, normalized_shape=32))
    assert y_fast.shape == x.shape and y_fast.dtype == x.dtype
    assert bool(jnp.all(y_fast == x))

    # Forced-materialization path: exercises the Pallas HBM->HBM DMA kernel.
    y_copy = jax.block_until_ready(
        dummy_layer_norm(x, normalized_shape=32, materialize=True)
    )
    assert y_copy.shape == x.shape and y_copy.dtype == x.dtype
    assert bool(jnp.all(y_copy == x))

    # Also exercise the kernel on a small packed-dtype (bf16) activation.
    x_bf16 = jax.random.normal(k2, (2, 64, 128), dtype=jnp.bfloat16)
    y_bf16 = jax.block_until_ready(
        dummy_layer_norm(x_bf16, normalized_shape=128, materialize=True)
    )
    assert y_bf16.shape == x_bf16.shape and y_bf16.dtype == x_bf16.dtype
    assert bool(jnp.all(y_bf16 == x_bf16))

    print("KERNEL_OK")
</pallas_src>

<mosaic_0001>
module attributes {stable_mosaic.version = 11 : i64} {
  func.func @_hbm_copy_kernel(%arg0: memref<2x8x32xf32, #tpu.memory_space<any>>, %arg1: memref<2x8x32xf32, #tpu.memory_space<any>>, %arg2: memref<!tpu.dma_semaphore, #tpu.memory_space<semaphore_mem>>) attributes {dimension_semantics = [], scalar_prefetch = 0 : i64, scratch_operands = 1 : i64, tpu.core_type = #tpu.core_type<tc>} {
    tpu.enqueue_dma source(%arg0 : memref<2x8x32xf32, #tpu.memory_space<any>>) target(%arg1 : memref<2x8x32xf32, #tpu.memory_space<any>>) target_semaphore(%arg2 : memref<!tpu.dma_semaphore, #tpu.memory_space<semaphore_mem>>)
    tpu.wait_dma2 semaphore(%arg2 : memref<!tpu.dma_semaphore, #tpu.memory_space<semaphore_mem>>) src(%arg0 : memref<2x8x32xf32, #tpu.memory_space<any>>) dst(%arg1 : memref<2x8x32xf32, #tpu.memory_space<any>>)
    return
  }
}

</mosaic_0001>

<llo_original>
// kernel: tpu_custom_call.1
$region0: #{tpu_custom_call.1}
  #allocation0 [shape = 'u32[]', space=smem, size = 0x4, offset = 0x4, fixed_abs, tag = 'smem constant byte address 0x4 - core index']
  #allocation1 [shape = 'u32[144,128]{1,0:T(1,128)}', space=vmem, size = 0x12000, scoped, tag = 'internal scratch']
  #allocation2 [shape = 's32[1]{0}', space=sflag, size = 0x4, scoped, tag = 'scratch operand']
  #allocation3 [shape = 's32[]', space=sflag, size = 0x4, offset = 0, fixed_abs, tag = 'sflag constant byte address 0x0 - dummy sync flag']
  #allocation4 [shape = 'u32[0]{0}', space=smem, size = 0, offset = 0, fixed_abs, tag = 'smem constant byte address 0x0 - null']
  %s0 = inlined_call_operand.hbm [shape: f32[2,8,32], index: 0, kind: input, shape index: {}]
  %s1 = inlined_call_operand.hbm [shape: f32[2,8,32], index: 1, kind: output, shape index: {}]
  %s2 = sld [smem:[#allocation0]]
  $region2: #{tpu_custom_call.1} parent=0
    _
  %s4 = ssub.s32 1, %s2
  %s5 = scalar_select 0, %s4, %s2
  %s7 = sshll.u32 1, 14
  %s8 = sxor.u32 4294967295, %s7
  %12 = dma.general %s0, 256, %s1, [#allocation2], 131072, [#allocation4], 0, 0
  %s13 = smul.u32 2, 8
  %s14 = smul.u32 %s13, 1
  %s15 = sshll.u32 %s14, 4
  %16 = dma.done [#allocation2], %s15
  %17 = vsyncmov [#allocation2]
  %s18 = vpop.sfrf %17
  %p19 = scmp.eq.s32.totalorder %s18, 0
  %p20 = pneg %p19
  %22 = shalt.err (%p20)

</llo_original>
